<compile_context>
chip_gen: v7x
topology: tpu7x:2x2x1
jax: 0.10.0
libtpu: 0.0.40
codegen_flags: <defaults>
</compile_context>

<pallas_src>
import functools

import jax
import jax.numpy as jnp
from jax.experimental import pallas as pl
from jax.experimental.pallas import tpu as pltpu

_LANES = 128
_MAX_BLOCK_ROWS = 4096        # 4096x128 f32 tile = 2 MiB; <=8 MiB double-buffered
_MIN_KERNEL_N = 64 * 1024     # below this a fused XLA elementwise op wins


def _logreg_kernel(w_ref, b_ref, x_ref, o_ref):
    # w_ref, b_ref: (1, 1) f32 in SMEM (scalar path, no VMEM vregs for params)
    # x_ref, o_ref: (block_rows, 128) f32 VMEM tiles (lane-dense slab)
    z = x_ref[...] * w_ref[0, 0] + b_ref[0, 0]        # VPU fused multiply-add
    # sigmoid(z) == 0.5 * (tanh(z/2) + 1): single EUP transcendental, no divide
    o_ref[...] = 0.5 * (jnp.tanh(0.5 * z) + 1.0)


def _pick_block_rows(rows: int) -> int:
    """N-adaptive row tile: aim for >=4 grid steps of 1-2 MiB tiles."""
    if rows <= 8:
        return rows                            # single full-extent block
    target = -(-rows // 4)                     # ~4 grid steps (cdiv)
    target = ((target + 7) // 8) * 8           # sublane multiple
    return max(8, min(_MAX_BLOCK_ROWS, target))


def _logreg_pallas(x, weight, bias):
    N = x.shape[0]
    rows = pl.cdiv(N, _LANES)
    n_pad = rows * _LANES                      # pad only to next multiple of 128
    block_rows = _pick_block_rows(rows)
    grid = (pl.cdiv(rows, block_rows),)        # ragged last block -> masked stores

    x_slab = jnp.pad(x.reshape(-1), (0, n_pad - N)).reshape(rows, _LANES)
    w2 = weight.reshape(1, 1).astype(jnp.float32)
    b2 = bias.reshape(1, 1).astype(jnp.float32)

    out_slab = pl.pallas_call(
        _logreg_kernel,
        out_shape=jax.ShapeDtypeStruct((rows, _LANES), jnp.float32),
        grid=grid,
        in_specs=[
            pl.BlockSpec(memory_space=pltpu.SMEM),                  # weight scalar
            pl.BlockSpec(memory_space=pltpu.SMEM),                  # bias scalar
            pl.BlockSpec((block_rows, _LANES), lambda i: (i, 0)),   # x tile
        ],
        out_specs=pl.BlockSpec((block_rows, _LANES), lambda i: (i, 0)),
        compiler_params=pltpu.CompilerParams(
            dimension_semantics=("parallel",)),
        cost_estimate=pl.CostEstimate(
            flops=2 * rows * _LANES,
            transcendentals=rows * _LANES,
            bytes_accessed=8 * rows * _LANES),
    )(w2, b2, x_slab)

    # strip the (<128-element) padded tail; under jit this fuses into a cheap slice
    return out_slab.reshape(-1)[:N].reshape(N, 1)


@functools.partial(jax.jit, static_argnames=("force_kernel",))
def logistic_regression_forward(x, weight, bias, *, force_kernel=False):
    """Computes sigmoid(x @ weight.T + bias) for nn.Linear(1, 1); x: (N, 1) f32."""
    N, D = x.shape
    assert D == 1, "kernel specializes nn.Linear(1, 1)"
    if not force_kernel and N < _MIN_KERNEL_N:
        # At tiny N (the spec's N=20) a fused XLA elementwise op beats any launch.
        return jax.nn.sigmoid(x * weight.reshape(1, 1) + bias.reshape(1, 1))
    return _logreg_pallas(x, weight, bias)


if __name__ == "__main__":
    # Dataset from the spec: x = torch.arange(-1, 1, 0.1).view(-1, 1) -> (20, 1)
    x = jnp.arange(-1.0, 1.0, 0.1, dtype=jnp.float32).reshape(-1, 1)

    # Deterministic init for nn.Linear(1, 1): weight (1, 1), bias (1,)
    key = jax.random.PRNGKey(0)
    kw, kb = jax.random.split(key)
    bound = 1.0  # 1/sqrt(fan_in), fan_in = 1
    weight = jax.random.uniform(kw, (1, 1), jnp.float32, -bound, bound)
    bias = jax.random.uniform(kb, (1,), jnp.float32, -bound, bound)

    # Spec-size run forced through the Pallas kernel (past the small-N fallback).
    yhat = logistic_regression_forward(x, weight, bias, force_kernel=True)
    jax.block_until_ready(yhat)
    ref = jax.nn.sigmoid(x @ weight.T + bias)
    assert yhat.shape == (x.shape[0], 1)
    assert jnp.allclose(yhat, ref, atol=1e-5), "mismatch vs reference (small N)"

    # Larger run to exercise the N-adaptive, multi-step, ragged-tail tiled grid.
    x_big = jax.random.normal(jax.random.PRNGKey(1), (300_000, 1), jnp.float32)
    yhat_big = logistic_regression_forward(x_big, weight, bias)
    jax.block_until_ready(yhat_big)
    ref_big = jax.nn.sigmoid(x_big @ weight.T + bias)
    assert yhat_big.shape == (x_big.shape[0], 1)
    assert jnp.allclose(yhat_big, ref_big, atol=1e-5), "mismatch vs reference (large N)"

    print("KERNEL_OK")
</pallas_src>

<mosaic_0001>
module attributes {stable_mosaic.version = 11 : i64} {
  func.func @_logreg_kernel(%arg0: i32, %arg1: memref<1x1xf32, #tpu.memory_space<smem>>, %arg2: memref<1x1xf32, #tpu.memory_space<smem>>, %arg3: memref<1x128xf32, #tpu.memory_space<vmem>>, %arg4: memref<1x128xf32, #tpu.memory_space<vmem>>) attributes {dimension_semantics = [#tpu.dimension_semantics<parallel>], iteration_bounds = array<i64: 1>, scalar_prefetch = 0 : i64, scratch_operands = 0 : i64, tpu.core_type = #tpu.core_type<tc>, window_params = [{transform_indices = @transform_0, window_bounds = array<i64: 1, 1>}, {transform_indices = @transform_1, window_bounds = array<i64: 1, 1>}, {transform_indices = @transform_2, window_bounds = array<i64: 1, 128>}, {transform_indices = @transform_3, window_bounds = array<i64: 1, 128>}]} {
    %c0 = arith.constant 0 : index
    %c0_0 = arith.constant 0 : index
    %0 = vector.load %arg3[%c0, %c0_0] : memref<1x128xf32, #tpu.memory_space<vmem>>, vector<1x128xf32>
    %c0_1 = arith.constant 0 : index
    %c0_2 = arith.constant 0 : index
    %1 = memref.load %arg1[%c0_1, %c0_2] : memref<1x1xf32, #tpu.memory_space<smem>>
    %2 = vector.broadcast %1 : f32 to vector<1x128xf32>
    %3 = arith.mulf %0, %2 : vector<1x128xf32>
    %c0_3 = arith.constant 0 : index
    %c0_4 = arith.constant 0 : index
    %4 = memref.load %arg2[%c0_3, %c0_4] : memref<1x1xf32, #tpu.memory_space<smem>>
    %5 = vector.broadcast %4 : f32 to vector<1x128xf32>
    %6 = arith.addf %3, %5 : vector<1x128xf32>
    %cst = arith.constant 5.000000e-01 : f32
    %7 = vector.broadcast %cst : f32 to vector<1x128xf32>
    %8 = arith.mulf %7, %6 : vector<1x128xf32>
    %9 = math.tanh %8 : vector<1x128xf32>
    %cst_5 = arith.constant 1.000000e+00 : f32
    %10 = vector.broadcast %cst_5 : f32 to vector<1x128xf32>
    %11 = arith.addf %9, %10 : vector<1x128xf32>
    %cst_6 = arith.constant 5.000000e-01 : f32
    %12 = vector.broadcast %cst_6 : f32 to vector<1x128xf32>
    %13 = arith.mulf %12, %11 : vector<1x128xf32>
    %c0_7 = arith.constant 0 : index
    %c0_8 = arith.constant 0 : index
    %14 = vector.load %arg4[%c0_7, %c0_8] : memref<1x128xf32, #tpu.memory_space<vmem>>, vector<1x128xf32>
    tpu.vector_store %arg4[%c0_7, %c0_8], %13 {strides = array<i32>} : memref<1x128xf32, #tpu.memory_space<vmem>>, vector<1x128xf32>,
    return
  }
  func.func @transform_0(%arg0: i32) -> (i32, i32) {
    %c0_i32 = arith.constant 0 : i32
    %c0_i32_0 = arith.constant 0 : i32
    %c0_i32_1 = arith.constant 0 : i32
    return %c0_i32, %c0_i32_0 : i32, i32
  }
  func.func @transform_1(%arg0: i32) -> (i32, i32) {
    %c0_i32 = arith.constant 0 : i32
    %c0_i32_0 = arith.constant 0 : i32
    %c0_i32_1 = arith.constant 0 : i32
    return %c0_i32, %c0_i32_0 : i32, i32
  }
  func.func @transform_2(%arg0: i32) -> (i32, i32) {
    %c0_i32 = arith.constant 0 : i32
    %c0_i32_0 = arith.constant 0 : i32
    return %arg0, %c0_i32 : i32, i32
  }
  func.func @transform_3(%arg0: i32) -> (i32, i32) {
    %c0_i32 = arith.constant 0 : i32
    %c0_i32_0 = arith.constant 0 : i32
    return %arg0, %c0_i32 : i32, i32
  }
}

</mosaic_0001>

<llo_original>
// kernel: logistic_regression_forward.1
$region0: #{logistic_regression_forward.1}
  #allocation0 [shape = 'u32[]', space=smem, size = 0x4, offset = 0x4, fixed_abs, tag = 'smem constant byte address 0x4 - core index']
  #allocation1 [shape = 'u32[144,128]{1,0:T(1,128)}', space=vmem, size = 0x12000, scoped, tag = 'internal scratch']
  #allocation2 [shape = 'f32[1,1]{1,0:T(1,128)S(6)}', space=smem, size = 0x200, scoped, tag = 'scoped memory for logistic_regression_forward.1']
  #allocation3 [shape = 'f32[1,1]{1,0:T(1,128)S(6)}', space=smem, size = 0x200, scoped, tag = 'scoped memory for logistic_regression_forward.1']
  %s0 = inlined_call_operand.<no memory space> [shape: f32[1,1], index: 0, kind: input, shape index: {}]
  %s1 = inlined_call_operand.<no memory space> [shape: f32[1,1], index: 1, kind: input, shape index: {}]
  %s2 = inlined_call_operand.vmem [shape: f32[1,128], index: 2, kind: input, shape index: {}]
  %s3 = inlined_call_operand.vmem [shape: f32[1,128], index: 3, kind: output, shape index: {}]
  %s4 = sld [smem:[#allocation0]]
  $region22: #{logistic_regression_forward.1} parent=0
    _
  %s6 = ssub.s32 1, %s4
  %s7 = scalar_select 0, %s6, %s4
  %8 = sst [smem:[#allocation2]] %s0
  %9 = sst [smem:[#allocation3]] %s1
  // Predicated region
  $region2: #{logistic_regression_forward.1} parent=0 // pred_check
    _
  $region3: #{logistic_regression_forward.1} parent=0 // pred_check_branch
    %11 = sbr.rel (0) target = $region5
  $region4: #{logistic_regression_forward.1} parent=0 // pred_region
    _
  $region5: #{logistic_regression_forward.1} parent=0 // pred_fallthru
    _
  // Predicated region
  $region6: #{logistic_regression_forward.1} parent=0 // pred_check
    _
  $region7: #{logistic_regression_forward.1} parent=0 // pred_check_branch
    %13 = sbr.rel (0) target = $region9
  $region8: #{logistic_regression_forward.1} parent=0 // pred_region
    _
  $region9: #{logistic_regression_forward.1} parent=0 // pred_fallthru
    _
  // Predicated region
  $region10: #{logistic_regression_forward.1} parent=0 // pred_check
    _
  $region11: #{logistic_regression_forward.1} parent=0 // pred_check_branch
    %15 = sbr.rel (0) target = $region13
  $region12: #{logistic_regression_forward.1} parent=0 // pred_region
    _
  $region13: #{logistic_regression_forward.1} parent=0 // pred_fallthru
    _
  %v16 = vld [vmem:[%s2] sm:$0x1]
  %s17 = sld [smem:[#allocation2]]
  %v18 = vstv %s17
  %v19 = vmul.f32 %v16, %v18
  %s20 = sld [smem:[#allocation3]]
  %v21 = vstv %s20
  %v22 = vadd.f32 %v19, %v21
  %v23 = vmul.f32 %v22, 0.5
  %v24 = vtanh.pop %v23
  %v25 = vadd.f32 %v24, 1.0
  %v26 = vmul.f32 %v25, 0.5
  %27 = vst [vmem:[%s3] sm:$0x1] %v26
  // Predicated region
  $region14: #{logistic_regression_forward.1} parent=0 // pred_check
    _
  $region15: #{logistic_regression_forward.1} parent=0 // pred_check_branch
    %29 = sbr.rel (0) target = $region17
  $region16: #{logistic_regression_forward.1} parent=0 // pred_region
    _
  $region17: #{logistic_regression_forward.1} parent=0 // pred_fallthru
    _
  // Predicated region
  $region18: #{logistic_regression_forward.1} parent=0 // pred_check
    _
  $region19: #{logistic_regression_forward.1} parent=0 // pred_check_branch
    %31 = sbr.rel (0) target = $region21
  $region20: #{logistic_regression_forward.1} parent=0 // pred_region
    _
  $region21: #{logistic_regression_forward.1} parent=0 // pred_fallthru
    _

</llo_original>
